<compile_context>
chip_gen: v7x
topology: tpu7x:2x2x1
jax: 0.10.0
libtpu: 0.0.40
codegen_flags: <defaults>
</compile_context>

<pallas_src>
import math
import functools

import numpy as np
import jax
import jax.numpy as jnp
from jax import lax
from jax.experimental import pallas as pl
from jax.experimental.pallas import tpu as pltpu


# --------------------------------------------------------------------------- #
# Helpers
# --------------------------------------------------------------------------- #
def _round_up(x, m):
    return ((x + m - 1) // m) * m


def _physical_vmem_bytes():
    """Physical VMEM per TensorCore; conservative 64 MiB fallback (v7x)."""
    try:
        info = pltpu.get_tpu_info()
        return int(getattr(info, "vmem_capacity_bytes", 64 << 20))
    except Exception:
        return 64 << 20


def _choose_tiles(out_features, in_features, itemsize, target_block_bytes):
    """Pick lane-dense (tile_out, tile_in) plus padded dims they divide exactly."""
    budget_elems = max(8 * 128, target_block_bytes // itemsize)
    in_rounded = _round_up(in_features, 128)
    if in_rounded * 8 <= budget_elems:
        # Full (padded) rows fit the block budget: keep the lane axis wide.
        tile_in = in_rounded
        max_rows = max(8, (budget_elems // tile_in) // 8 * 8)
        tile_out = min(_round_up(out_features, 8), max_rows)
    else:
        # A single row is enormous -> 2-D tiling of the lane axis.
        tile_in = min(in_rounded, max(128, (budget_elems // 8) // 128 * 128))
        tile_out = 8
    out_pad = _round_up(out_features, tile_out)
    in_pad = _round_up(in_features, tile_in)

    # Expose >=2 blocks along a "parallel" axis so both v7x TensorCores get
    # work (harmless extra grid step on single-TC v5e/v6e; skipped for tiny
    # problems where the ~0.35 us per-step overhead would dominate).
    if ((out_pad // tile_out) * (in_pad // tile_in) == 1
            and out_pad >= 16
            and out_pad * in_pad * itemsize >= (1 << 20)):
        tile_out = _round_up((out_pad + 1) // 2, 8)
        out_pad = _round_up(out_features, tile_out)
    return tile_out, tile_in, out_pad, in_pad


# --------------------------------------------------------------------------- #
# Kernel
# --------------------------------------------------------------------------- #
def _flr_kernel(mean_raw_ref, lvs_ref, mean_ref, var_ref, partial_ref, *,
                sqrt_prec, log_var_lr, valid_rows, valid_cols, need_mask):
    """One (tile_out, tile_in) block.

    Elementwise (f32 compute regardless of in/out dtype):
      mean = raw * sqrt_prec
      lv   = lvs * log_var_lr + 2*log(sqrt_prec)
      var  = exp(lv)
    Partial sums reduced along the sublane (row) axis only, lanes kept:
      partial[0, :] = sum(mean^2, rows)
      partial[1, :] = sum(var,    rows)
      partial[2, :] = sum(lv,     rows)
    Padded rows/cols (when the problem was rounded up to the tile grid) are
    masked to zero so the wrapper can sum the partials directly.
    """
    raw = mean_raw_ref[...].astype(jnp.float32)
    lvs = lvs_ref[...].astype(jnp.float32)

    mean = raw * sqrt_prec
    log_var = lvs * log_var_lr + 2.0 * math.log(sqrt_prec)
    var = jnp.exp(log_var)

    mean_ref[...] = mean.astype(mean_ref.dtype)
    var_ref[...] = var.astype(var_ref.dtype)

    if need_mask:
        tile_out, tile_in = mean.shape
        rows = (pl.program_id(0) * tile_out
                + lax.broadcasted_iota(jnp.int32, (tile_out, tile_in), 0))
        cols = (pl.program_id(1) * tile_in
                + lax.broadcasted_iota(jnp.int32, (tile_out, tile_in), 1))
        valid = (rows < valid_rows) & (cols < valid_cols)
        zero = jnp.zeros_like(mean)
        m2_src = jnp.where(valid, mean * mean, zero)
        var_src = jnp.where(valid, var, zero)
        lv_src = jnp.where(valid, log_var, zero)
    else:
        m2_src = mean * mean
        var_src = var
        lv_src = log_var

    # Direct row stores (no concatenate/reshape -> no extra VMEM copy).
    partial_ref[0:1, :] = jnp.sum(m2_src, axis=0, keepdims=True)
    partial_ref[1:2, :] = jnp.sum(var_src, axis=0, keepdims=True)
    partial_ref[2:3, :] = jnp.sum(lv_src, axis=0, keepdims=True)


# --------------------------------------------------------------------------- #
# Forward pass (NealPrior / FactorisedPrior branch)
# --------------------------------------------------------------------------- #
@functools.partial(
    jax.jit,
    static_argnames=("in_features", "log_var_lr", "sample_shape", "out_dtype"))
def factorised_lr_param_forward(post_mean_raw, post_log_var_scaled, *,
                                in_features, log_var_lr=1.0,
                                sample_shape=(), out_dtype=jnp.float32):
    """Returns (post_mean, post_var, logpq).

    Note: when out_dtype is lower precision (e.g. bf16), the returned tensors
    are the cast values while logpq is computed from the pre-cast f32 values
    (numerically the better choice).
    """
    out_features, in_feat = post_mean_raw.shape
    assert in_feat == in_features
    assert post_log_var_scaled.shape == (out_features, in_features)

    in_itemsize = jnp.dtype(post_mean_raw.dtype).itemsize
    out_itemsize = jnp.dtype(out_dtype).itemsize

    # Generation-aware block sizing and VMEM cap.
    phys_vmem = _physical_vmem_bytes()
    target_block_bytes = (4 << 20) if phys_vmem >= (100 << 20) else (2 << 20)
    tile_out, tile_in, out_pad, in_pad = _choose_tiles(
        out_features, in_features, max(in_itemsize, out_itemsize),
        target_block_bytes)
    n_i = out_pad // tile_out
    n_j = in_pad // tile_in
    need_mask = (out_pad != out_features) or (in_pad != in_features)

    mean_raw = post_mean_raw
    lvs = post_log_var_scaled
    if need_mask:
        pad_cfg = ((0, out_pad - out_features), (0, in_pad - in_features))
        mean_raw = jnp.pad(mean_raw, pad_cfg)
        lvs = jnp.pad(lvs, pad_cfg)

    sqrt_prec = 1.0 / math.sqrt(in_features)
    kernel = functools.partial(
        _flr_kernel, sqrt_prec=sqrt_prec, log_var_lr=log_var_lr,
        valid_rows=out_features, valid_cols=in_features, need_mask=need_mask)

    # Double-buffered VMEM footprint: 2 inputs + 2 outputs + partials block.
    block_elems = tile_out * tile_in
    needed = 2 * (2 * block_elems * in_itemsize
                  + 2 * block_elems * out_itemsize
                  + 3 * tile_in * 4)
    vmem_limit = int(min(max(needed + (8 << 20), 32 << 20),
                         phys_vmem * 3 // 4))

    post_mean, post_var, partials = pl.pallas_call(
        kernel,
        grid=(n_i, n_j),
        out_shape=(
            jax.ShapeDtypeStruct((out_pad, in_pad), out_dtype),
            jax.ShapeDtypeStruct((out_pad, in_pad), out_dtype),
            jax.ShapeDtypeStruct((n_i, 3, in_pad), jnp.float32),
        ),
        in_specs=[
            pl.BlockSpec((tile_out, tile_in), lambda i, j: (i, j)),
            pl.BlockSpec((tile_out, tile_in), lambda i, j: (i, j)),
        ],
        out_specs=(
            pl.BlockSpec((tile_out, tile_in), lambda i, j: (i, j)),
            pl.BlockSpec((tile_out, tile_in), lambda i, j: (i, j)),
            pl.BlockSpec((None, 3, tile_in), lambda i, j: (i, 0, j)),
        ),
        compiler_params=pltpu.CompilerParams(
            dimension_semantics=("parallel", "parallel"),
            vmem_limit_bytes=vmem_limit),
    )(mean_raw, lvs)

    if need_mask:
        post_mean = post_mean[:out_features, :in_features]
        post_var = post_var[:out_features, :in_features]

    # Scalar KL assembly (fused under the same jit).  NealPrior: prec = in_features.
    # Padded rows/cols were masked to 0 in the kernel, so plain sums are exact.
    sum_m2 = jnp.sum(partials[:, 0, :])
    sum_var = jnp.sum(partials[:, 1, :])
    sum_lv = jnp.sum(partials[:, 2, :])
    prior_prec_scale = jnp.float32(in_features)
    numel = float(out_features * in_features)
    kl = (0.5 * (sum_m2 + sum_var) * prior_prec_scale
          - 0.5 * numel
          - 0.5 * numel * jnp.log(prior_prec_scale)
          - 0.5 * sum_lv)
    logpq = -kl * jnp.ones(sample_shape, dtype=jnp.float32)

    # TODO(synk): the non-FactorisedPrior branch (Normal.rsample +
    # mvnormal_log_prob against a structured prior precision) is not exercised
    # by the default NealPrior and is not implemented here.
    return post_mean, post_var, logpq


# --------------------------------------------------------------------------- #
# Pure-JAX reference
# --------------------------------------------------------------------------- #
def _reference(post_mean_raw, post_log_var_scaled, in_features, log_var_lr,
               sample_shape):
    sqrt_prec = 1.0 / math.sqrt(in_features)
    mean = post_mean_raw * sqrt_prec
    lv = post_log_var_scaled * log_var_lr + 2.0 * math.log(sqrt_prec)
    var = jnp.exp(lv)
    prec = float(in_features)
    numel = post_mean_raw.size
    kl = (0.5 * (jnp.sum(mean ** 2) + jnp.sum(var)) * prec
          - 0.5 * numel - 0.5 * numel * math.log(prec)
          - 0.5 * jnp.sum(lv))
    logpq = -kl * jnp.ones(sample_shape, dtype=jnp.float32)
    return mean, var, logpq


# --------------------------------------------------------------------------- #
# Demo / correctness checks
# --------------------------------------------------------------------------- #
if __name__ == "__main__":
    mean_init_mult = 1.0
    var_init_mult = 0.001
    log_var_lr = 1.0

    # ---- Case 1: friendly shapes (conv feature-map input), f32 outputs ---- #
    in_shape = (4, 16, 16)                  # (C, H, W)
    in_features = int(np.prod(in_shape))    # 1024
    out_features = 32
    sample_shape = (3,)

    key = jax.random.PRNGKey(0)
    post_mean_raw = mean_init_mult * jax.random.normal(
        key, (out_features, in_features), dtype=jnp.float32)
    lv_init = math.log(var_init_mult) / log_var_lr
    post_log_var_scaled = lv_init * jnp.ones(
        (out_features, in_features), dtype=jnp.float32)

    post_mean, post_var, logpq = factorised_lr_param_forward(
        post_mean_raw, post_log_var_scaled,
        in_features=in_features, log_var_lr=log_var_lr,
        sample_shape=sample_shape)
    jax.block_until_ready((post_mean, post_var, logpq))

    ref_mean, ref_var, ref_logpq = _reference(
        post_mean_raw, post_log_var_scaled, in_features, log_var_lr,
        sample_shape)
    np.testing.assert_allclose(np.asarray(post_mean), np.asarray(ref_mean),
                               rtol=1e-6, atol=1e-6)
    np.testing.assert_allclose(np.asarray(post_var), np.asarray(ref_var),
                               rtol=1e-6, atol=1e-9)
    np.testing.assert_allclose(np.asarray(logpq), np.asarray(ref_logpq),
                               rtol=1e-4)

    # ---- Case 2: same inputs, bf16 outputs (HBM-traffic saver) ------------ #
    pm_bf, pv_bf, logpq_bf = factorised_lr_param_forward(
        post_mean_raw, post_log_var_scaled,
        in_features=in_features, log_var_lr=log_var_lr,
        sample_shape=sample_shape, out_dtype=jnp.bfloat16)
    jax.block_until_ready((pm_bf, pv_bf, logpq_bf))
    np.testing.assert_allclose(np.asarray(pm_bf.astype(jnp.float32)),
                               np.asarray(ref_mean), rtol=2e-2, atol=1e-6)
    np.testing.assert_allclose(np.asarray(pv_bf.astype(jnp.float32)),
                               np.asarray(ref_var), rtol=2e-2, atol=1e-9)
    np.testing.assert_allclose(np.asarray(logpq_bf), np.asarray(ref_logpq),
                               rtol=1e-4)

    # ---- Case 3: awkward shapes (exercise the pad + mask path) ------------ #
    out2, in2 = 20, 200
    k1, k2 = jax.random.split(jax.random.PRNGKey(0))
    pm_raw2 = jax.random.normal(k1, (out2, in2), dtype=jnp.float32)
    lvs2 = (lv_init * jnp.ones((out2, in2), dtype=jnp.float32)
            + 0.1 * jax.random.normal(k2, (out2, in2), dtype=jnp.float32))
    pm2, pv2, logpq2 = factorised_lr_param_forward(
        pm_raw2, lvs2, in_features=in2, log_var_lr=log_var_lr,
        sample_shape=(2,))
    jax.block_until_ready((pm2, pv2, logpq2))
    rm2, rv2, rl2 = _reference(pm_raw2, lvs2, in2, log_var_lr, (2,))
    np.testing.assert_allclose(np.asarray(pm2), np.asarray(rm2),
                               rtol=1e-6, atol=1e-6)
    np.testing.assert_allclose(np.asarray(pv2), np.asarray(rv2),
                               rtol=1e-6, atol=1e-9)
    np.testing.assert_allclose(np.asarray(logpq2), np.asarray(rl2),
                               rtol=1e-4)

    print("KERNEL_OK")
</pallas_src>

<mosaic_0001>
module attributes {stable_mosaic.version = 11 : i64} {
  func.func @_flr_kernel(%arg0: i32, %arg1: i32, %arg2: memref<32x1024xf32, #tpu.memory_space<vmem>>, %arg3: memref<32x1024xf32, #tpu.memory_space<vmem>>, %arg4: memref<32x1024xf32, #tpu.memory_space<vmem>>, %arg5: memref<32x1024xf32, #tpu.memory_space<vmem>>, %arg6: memref<1x3x1024xf32, #tpu.memory_space<vmem>>) attributes {dimension_semantics = [#tpu.dimension_semantics<parallel>, #tpu.dimension_semantics<parallel>], iteration_bounds = array<i64: 1, 1>, scalar_prefetch = 0 : i64, scratch_operands = 0 : i64, tpu.core_type = #tpu.core_type<tc>, window_params = [{transform_indices = @transform_0, window_bounds = array<i64: 32, 1024>}, {transform_indices = @transform_1, window_bounds = array<i64: 32, 1024>}, {transform_indices = @transform_2, window_bounds = array<i64: 32, 1024>}, {transform_indices = @transform_3, window_bounds = array<i64: 32, 1024>}, {transform_indices = @transform_4, window_bounds = array<i64: 1, 3, 1024>}]} {
    %c0 = arith.constant 0 : index
    %c0_0 = arith.constant 0 : index
    %0 = vector.load %arg2[%c0, %c0_0] : memref<32x1024xf32, #tpu.memory_space<vmem>>, vector<32x1024xf32>
    %c0_1 = arith.constant 0 : index
    %c0_2 = arith.constant 0 : index
    %1 = vector.load %arg3[%c0_1, %c0_2] : memref<32x1024xf32, #tpu.memory_space<vmem>>, vector<32x1024xf32>
    %cst = arith.constant 3.125000e-02 : f32
    %2 = vector.broadcast %cst : f32 to vector<32x1024xf32>
    %3 = arith.mulf %0, %2 : vector<32x1024xf32>
    %cst_3 = arith.constant 1.000000e+00 : f32
    %4 = vector.broadcast %cst_3 : f32 to vector<32x1024xf32>
    %5 = arith.mulf %1, %4 : vector<32x1024xf32>
    %cst_4 = arith.constant -6.93147182 : f32
    %6 = vector.broadcast %cst_4 : f32 to vector<32x1024xf32>
    %7 = arith.addf %5, %6 : vector<32x1024xf32>
    %8 = math.exp %7 : vector<32x1024xf32>
    %c0_5 = arith.constant 0 : index
    %c0_6 = arith.constant 0 : index
    %9 = vector.load %arg4[%c0_5, %c0_6] : memref<32x1024xf32, #tpu.memory_space<vmem>>, vector<32x1024xf32>
    tpu.vector_store %arg4[%c0_5, %c0_6], %3 {strides = array<i32>} : memref<32x1024xf32, #tpu.memory_space<vmem>>, vector<32x1024xf32>,
    %c0_7 = arith.constant 0 : index
    %c0_8 = arith.constant 0 : index
    %10 = vector.load %arg5[%c0_7, %c0_8] : memref<32x1024xf32, #tpu.memory_space<vmem>>, vector<32x1024xf32>
    tpu.vector_store %arg5[%c0_7, %c0_8], %8 {strides = array<i32>} : memref<32x1024xf32, #tpu.memory_space<vmem>>, vector<32x1024xf32>,
    %11 = arith.mulf %3, %3 : vector<32x1024xf32>
    %cst_9 = arith.constant dense<0.000000e+00> : vector<1024xf32>
    %12 = vector.multi_reduction <add>, %11, %cst_9 [0] : vector<32x1024xf32> to vector<1024xf32>
    %13 = vector.shape_cast %12 : vector<1024xf32> to vector<1x1024xf32>
    %c0_10 = arith.constant 0 : index
    %c0_11 = arith.constant 0 : index
    %c0_12 = arith.constant 0 : index
    %14 = vector.load %arg6[%c0_10, %c0_11, %c0_12] : memref<1x3x1024xf32, #tpu.memory_space<vmem>>, vector<1x1x1024xf32>
    %15 = vector.shape_cast %14 : vector<1x1x1024xf32> to vector<1x1024xf32>
    %16 = vector.shape_cast %13 : vector<1x1024xf32> to vector<1x1x1024xf32>
    tpu.vector_store %arg6[%c0_10, %c0_11, %c0_12], %16 {strides = array<i32>} : memref<1x3x1024xf32, #tpu.memory_space<vmem>>, vector<1x1x1024xf32>,
    %cst_13 = arith.constant dense<0.000000e+00> : vector<1024xf32>
    %17 = vector.multi_reduction <add>, %8, %cst_13 [0] : vector<32x1024xf32> to vector<1024xf32>
    %18 = vector.shape_cast %17 : vector<1024xf32> to vector<1x1024xf32>
    %c0_14 = arith.constant 0 : index
    %c1 = arith.constant 1 : index
    %c0_15 = arith.constant 0 : index
    %19 = vector.load %arg6[%c0_14, %c1, %c0_15] : memref<1x3x1024xf32, #tpu.memory_space<vmem>>, vector<1x1x1024xf32>
    %20 = vector.shape_cast %19 : vector<1x1x1024xf32> to vector<1x1024xf32>
    %21 = vector.shape_cast %18 : vector<1x1024xf32> to vector<1x1x1024xf32>
    tpu.vector_store %arg6[%c0_14, %c1, %c0_15], %21 {strides = array<i32>} : memref<1x3x1024xf32, #tpu.memory_space<vmem>>, vector<1x1x1024xf32>,
    %cst_16 = arith.constant dense<0.000000e+00> : vector<1024xf32>
    %22 = vector.multi_reduction <add>, %7, %cst_16 [0] : vector<32x1024xf32> to vector<1024xf32>
    %23 = vector.shape_cast %22 : vector<1024xf32> to vector<1x1024xf32>
    %c0_17 = arith.constant 0 : index
    %c2 = arith.constant 2 : index
    %c0_18 = arith.constant 0 : index
    %24 = vector.load %arg6[%c0_17, %c2, %c0_18] : memref<1x3x1024xf32, #tpu.memory_space<vmem>>, vector<1x1x1024xf32>
    %25 = vector.shape_cast %24 : vector<1x1x1024xf32> to vector<1x1024xf32>
    %26 = vector.shape_cast %23 : vector<1x1024xf32> to vector<1x1x1024xf32>
    tpu.vector_store %arg6[%c0_17, %c2, %c0_18], %26 {strides = array<i32>} : memref<1x3x1024xf32, #tpu.memory_space<vmem>>, vector<1x1x1024xf32>,
    return
  }
  func.func @transform_0(%arg0: i32, %arg1: i32) -> (i32, i32) {
    %c0_i32 = arith.constant 0 : i32
    return %arg0, %arg1 : i32, i32
  }
  func.func @transform_1(%arg0: i32, %arg1: i32) -> (i32, i32) {
    %c0_i32 = arith.constant 0 : i32
    return %arg0, %arg1 : i32, i32
  }
  func.func @transform_2(%arg0: i32, %arg1: i32) -> (i32, i32) {
    %c0_i32 = arith.constant 0 : i32
    return %arg0, %arg1 : i32, i32
  }
  func.func @transform_3(%arg0: i32, %arg1: i32) -> (i32, i32) {
    %c0_i32 = arith.constant 0 : i32
    return %arg0, %arg1 : i32, i32
  }
  func.func @transform_4(%arg0: i32, %arg1: i32) -> (i32, i32, i32) {
    %c0_i32 = arith.constant 0 : i32
    %c0_i32_0 = arith.constant 0 : i32
    return %arg0, %c0_i32, %arg1 : i32, i32, i32
  }
}

</mosaic_0001>

<llo_original>
// kernel: mul.7
$region0: #{mul.7}
  #allocation2 [shape = 's32[1]{0}', space=sflag, size = 0x4, scoped, tag = 'scoped memory for mul.7']
  %s0 = inlined_call_operand.<no memory space> [shape: f32[], index: 0, kind: input, shape index: {}]
  %s1 = inlined_call_operand.hbm [shape: f32[3], index: 1, kind: output, shape index: {}]
  %v2 = vstv %s0
  $region1: #{mul.7} parent=0
    #allocation0 [shape = 'u8[512]{0}', space=vmem, size = 0x400, scoped, tag = 'operand span for operand 1']
    #allocation1 [shape = 's32[1]{0}', space=sflag, size = 0x4, scoped, tag = 'scoped memory for mul.7']
    %3 = vsyncpa [#allocation1], 0
    %4 = vst [vmem:[#allocation0] sm:$0x1] %v2
    %s6 = ssub.s32 16, 16
    %7 = vsyncadd [#allocation1], %s6
    %s9 = sshll.u32 [#allocation0], 4
    %s10 = int_to_ptr.vmem [resolvable:$true] %s9
    %12 = dma.vmem_to_hbm [thread:$0]  %s10, 16, %s1, [#allocation1]
    %13 = dma.done [#allocation1], 16
    %14 = vsyncpa [#allocation1], 1

// kernel: factorised_lr_param_forward.1
$region0: #{factorised_lr_param_forward.1}
  #allocation0 [shape = 'u32[]', space=smem, size = 0x4, offset = 0x4, fixed_abs, tag = 'smem constant byte address 0x4 - core index']
  #allocation1 [shape = 'u32[144,128]{1,0:T(1,128)}', space=vmem, size = 0x12000, scoped, tag = 'internal scratch']
  %s0 = inlined_call_operand.hbm [shape: f32[32,1024], index: 0, kind: input, shape index: {}]
  %s1 = inlined_call_operand.hbm [shape: f32[32,1024], index: 1, kind: input, shape index: {}]
  %s2 = inlined_call_operand.hbm [shape: f32[32,1024], index: 2, kind: output, shape index: {0}]
  %s3 = inlined_call_operand.hbm [shape: f32[32,1024], index: 3, kind: output, shape index: {1}]
  %s4 = inlined_call_operand.vmem [shape: f32[1,3,1024], index: 4, kind: output, shape index: {2}]
  %5 = xla_tuple %s2, %s3, %s4
  %s6 = sld [smem:[#allocation0]]
  $region42: #{factorised_lr_param_forward.1} parent=0
    _
  %s8 = ssub.s32 1, %s6
  %s9 = scalar_select 0, %s8, %s6
  $region1: #{factorised_lr_param_forward.1} parent=0
    #allocation2 [shape = 'u8[131072]{0}', space=vmem, size = 0x20000, scoped, tag = 'input window, operand 0, single buffered']
    #allocation3 [shape = 's32[1]{0}', space=sflag, size = 0x4, scoped, tag = 'scoped memory for factorised_lr_param_forward.1']
    #allocation4 [shape = 's32[1]{0}', space=sflag, size = 0x4, scoped, tag = 'scoped memory for factorised_lr_param_forward.1']
    #allocation5 [shape = 'u8[131072]{0}', space=vmem, size = 0x20000, scoped, tag = 'input window, operand 1, single buffered']
    #allocation6 [shape = 's32[1]{0}', space=sflag, size = 0x4, scoped, tag = 'scoped memory for factorised_lr_param_forward.1']
    #allocation7 [shape = 'u8[131072]{0}', space=vmem, size = 0x20000, scoped, tag = 'output window, operand 0, single buffered']
    #allocation8 [shape = 'u8[131072]{0}', space=vmem, size = 0x20000, scoped, tag = 'output window, operand 1, single buffered']
    #allocation9 [shape = 's32[1]{0}', space=sflag, size = 0x4, scoped, tag = 'scoped memory for factorised_lr_param_forward.1']
    %10 = vsyncpa [#allocation3], 0
    %11 = vsyncpa [#allocation6], 0
    %12 = vsyncpa [#allocation4], 0
    %13 = vsyncpa [#allocation9], 0
    // Predicated region
    $region2: #{factorised_lr_param_forward.1} parent=1 // pred_check
      _
    $region3: #{factorised_lr_param_forward.1} parent=1 // pred_check_branch
      %15 = sbr.rel (0) target = $region5
    $region4: #{factorised_lr_param_forward.1} parent=1 // pred_region
      %s17 = ssub.s32 4096, 4096
      %18 = vsyncadd [#allocation3], %s17
      %s19 = sshll.u32 [#allocation2], 4
      %s20 = int_to_ptr.vmem [resolvable:$true] %s19
      %25 = dma.hbm_to_vmem [thread:$0]  %s0, 4096, %s20, [#allocation3], 1024, 1024, 64
    $region5: #{factorised_lr_param_forward.1} parent=1 // pred_fallthru
      _
    // Predicated region
    $region6: #{factorised_lr_param_forward.1} parent=1 // pred_check
      _
    $region7: #{factorised_lr_param_forward.1} parent=1 // pred_check_branch
      %27 = sbr.rel (0) target = $region9
    $region8: #{factorised_lr_param_forward.1} parent=1 // pred_region
      %s29 = ssub.s32 4096, 4096
      %30 = vsyncadd [#allocation6], %s29
      %s31 = sshll.u32 [#allocation5], 4
      %s32 = int_to_ptr.vmem [resolvable:$true] %s31
      %37 = dma.hbm_to_vmem [thread:$0]  %s1, 4096, %s32, [#allocation6], 1024, 1024, 64
    $region9: #{factorised_lr_param_forward.1} parent=1 // pred_fallthru
      _
    // Predicated region
    $region10: #{factorised_lr_param_forward.1} parent=1 // pred_check
      _
    $region11: #{factorised_lr_param_forward.1} parent=1 // pred_check_branch
      %39 = sbr.rel (0) target = $region13
    $region12: #{factorised_lr_param_forward.1} parent=1 // pred_region
      %40 = dma.done [#allocation3], 4096
    $region13: #{factorised_lr_param_forward.1} parent=1 // pred_fallthru
      _
    // Predicated region
    $region14: #{factorised_lr_param_forward.1} parent=1 // pred_check
      _
    $region15: #{factorised_lr_param_forward.1} parent=1 // pred_check_branch
      %42 = sbr.rel (0) target = $region17
    $region16: #{factorised_lr_param_forward.1} parent=1 // pred_region
      %43 = dma.done [#allocation6], 4096
    $region17: #{factorised_lr_param_forward.1} parent=1 // pred_fallthru
      _
    %v44 = vld [vmem:[#allocation2] sm:$0xff]
    %v45 = vld [vmem:[#allocation2 + $0x8] sm:$0xff]
    %v46 = vld [vmem:[#allocation2 + $0x10] sm:$0xff]
    %v47 = vld [vmem:[#allocation2 + $0x18] sm:$0xff]
    %v48 = vld [vmem:[#allocation2 + $0x20] sm:$0xff]
    %v49 = vld [vmem:[#allocation2 + $0x28] sm:$0xff]
    %v50 = vld [vmem:[#allocation2 + $0x30] sm:$0xff]
    %v51 = vld [vmem:[#allocation2 + $0x38] sm:$0xff]
    %v52 = vld [vmem:[#allocation2 + $0x40] sm:$0xff]
    %v53 = vld [vmem:[#allocation2 + $0x48] sm:$0xff]
    %v54 = vld [vmem:[#allocation2 + $0x50] sm:$0xff]
    %v55 = vld [vmem:[#allocation2 + $0x58] sm:$0xff]
    %v56 = vld [vmem:[#allocation2 + $0x60] sm:$0xff]
    %v57 = vld [vmem:[#allocation2 + $0x68] sm:$0xff]
    %v58 = vld [vmem:[#allocation2 + $0x70] sm:$0xff]
    %v59 = vld [vmem:[#allocation2 + $0x78] sm:$0xff]
    %v60 = vld [vmem:[#allocation2 + $0x80] sm:$0xff]
    %v61 = vld [vmem:[#allocation2 + $0x88] sm:$0xff]
    %v62 = vld [vmem:[#allocation2 + $0x90] sm:$0xff]
    %v63 = vld [vmem:[#allocation2 + $0x98] sm:$0xff]
    %v64 = vld [vmem:[#allocation2 + $0xa0] sm:$0xff]
    %v65 = vld [vmem:[#allocation2 + $0xa8] sm:$0xff]
    %v66 = vld [vmem:[#allocation2 + $0xb0] sm:$0xff]
    %v67 = vld [vmem:[#allocation2 + $0xb8] sm:$0xff]
    %v68 = vld [vmem:[#allocation2 + $0xc0] sm:$0xff]
    %v69 = vld [vmem:[#allocation2 + $0xc8] sm:$0xff]
    %v70 = vld [vmem:[#allocation2 + $0xd0] sm:$0xff]
    %v71 = vld [vmem:[#allocation2 + $0xd8] sm:$0xff]
    %v72 = vld [vmem:[#allocation2 + $0xe0] sm:$0xff]
    %v73 = vld [vmem:[#allocation2 + $0xe8] sm:$0xff]
    %v74 = vld [vmem:[#allocation2 + $0xf0] sm:$0xff]
    %v75 = vld [vmem:[#allocation2 + $0xf8] sm:$0xff]
    %v76 = vld [vmem:[#allocation5] sm:$0xff]
    %v77 = vld [vmem:[#allocation5 + $0x8] sm:$0xff]
    %v78 = vld [vmem:[#allocation5 + $0x10] sm:$0xff]
    %v79 = vld [vmem:[#allocation5 + $0x18] sm:$0xff]
    %v80 = vld [vmem:[#allocation5 + $0x20] sm:$0xff]
    %v81 = vld [vmem:[#allocation5 + $0x28] sm:$0xff]
    %v82 = vld [vmem:[#allocation5 + $0x30] sm:$0xff]
    %v83 = vld [vmem:[#allocation5 + $0x38] sm:$0xff]
    %v84 = vld [vmem:[#allocation5 + $0x40] sm:$0xff]
    %v85 = vld [vmem:[#allocation5 + $0x48] sm:$0xff]
    %v86 = vld [vmem:[#allocation5 + $0x50] sm:$0xff]
    %v87 = vld [vmem:[#allocation5 + $0x58] sm:$0xff]
    %v88 = vld [vmem:[#allocation5 + $0x60] sm:$0xff]
    %v89 = vld [vmem:[#allocation5 + $0x68] sm:$0xff]
    %v90 = vld [vmem:[#allocation5 + $0x70] sm:$0xff]
    %v91 = vld [vmem:[#allocation5 + $0x78] sm:$0xff]
    %v92 = vld [vmem:[#allocation5 + $0x80] sm:$0xff]
    %v93 = vld [vmem:[#allocation5 + $0x88] sm:$0xff]
    %v94 = vld [vmem:[#allocation5 + $0x90] sm:$0xff]
    %v95 = vld [vmem:[#allocation5 + $0x98] sm:$0xff]
    %v96 = vld [vmem:[#allocation5 + $0xa0] sm:$0xff]
    %v97 = vld [vmem:[#allocation5 + $0xa8] sm:$0xff]
    %v98 = vld [vmem:[#allocation5 + $0xb0] sm:$0xff]
    %v99 = vld [vmem:[#allocation5 + $0xb8] sm:$0xff]
    %v100 = vld [vmem:[#allocation5 + $0xc0] sm:$0xff]
    %v101 = vld [vmem:[#allocation5 + $0xc8] sm:$0xff]
    %v102 = vld [vmem:[#allocation5 + $0xd0] sm:$0xff]
    %v103 = vld [vmem:[#allocation5 + $0xd8] sm:$0xff]
    %v104 = vld [vmem:[#allocation5 + $0xe0] sm:$0xff]
    %v105 = vld [vmem:[#allocation5 + $0xe8] sm:$0xff]
    %v106 = vld [vmem:[#allocation5 + $0xf0] sm:$0xff]
    %v107 = vld [vmem:[#allocation5 + $0xf8] sm:$0xff]
    %v108 = vmul.f32 %v44, 0.03125
    %v109 = vmul.f32 %v45, 0.03125
    %v110 = vmul.f32 %v46, 0.03125
    %v111 = vmul.f32 %v47, 0.03125
    %v112 = vmul.f32 %v48, 0.03125
    %v113 = vmul.f32 %v49, 0.03125
    %v114 = vmul.f32 %v50, 0.03125
    %v115 = vmul.f32 %v51, 0.03125
    %v116 = vmul.f32 %v52, 0.03125
    %v117 = vmul.f32 %v53, 0.03125
    %v118 = vmul.f32 %v54, 0.03125
    %v119 = vmul.f32 %v55, 0.03125
    %v120 = vmul.f32 %v56, 0.03125
    %v121 = vmul.f32 %v57, 0.03125
    %v122 = vmul.f32 %v58, 0.03125
    %v123 = vmul.f32 %v59, 0.03125
    %v124 = vmul.f32 %v60, 0.03125
    %v125 = vmul.f32 %v61, 0.03125
    %v126 = vmul.f32 %v62, 0.03125
    %v127 = vmul.f32 %v63, 0.03125
    %v128 = vmul.f32 %v64, 0.03125
    %v129 = vmul.f32 %v65, 0.03125
    %v130 = vmul.f32 %v66, 0.03125
    %v131 = vmul.f32 %v67, 0.03125
    %v132 = vmul.f32 %v68, 0.03125
    %v133 = vmul.f32 %v69, 0.03125
    %v134 = vmul.f32 %v70, 0.03125
    %v135 = vmul.f32 %v71, 0.03125
    %v136 = vmul.f32 %v72, 0.03125
    %v137 = vmul.f32 %v73, 0.03125
    %v138 = vmul.f32 %v74, 0.03125
    %v139 = vmul.f32 %v75, 0.03125
    %v140 = vadd.f32 %v76, -6.931472
    %v141 = vadd.f32 %v77, -6.931472
    %v142 = vadd.f32 %v78, -6.931472
    %v143 = vadd.f32 %v79, -6.931472
    %v144 = vadd.f32 %v80, -6.931472
    %v145 = vadd.f32 %v81, -6.931472
    %v146 = vadd.f32 %v82, -6.931472
    %v147 = vadd.f32 %v83, -6.931472
    %v148 = vadd.f32 %v84, -6.931472
    %v149 = vadd.f32 %v85, -6.931472
    %v150 = vadd.f32 %v86, -6.931472
    %v151 = vadd.f32 %v87, -6.931472
    %v152 = vadd.f32 %v88, -6.931472
    %v153 = vadd.f32 %v89, -6.931472
    %v154 = vadd.f32 %v90, -6.931472
    %v155 = vadd.f32 %v91, -6.931472
    %v156 = vadd.f32 %v92, -6.931472
    %v157 = vadd.f32 %v93, -6.931472
    %v158 = vadd.f32 %v94, -6.931472
    %v159 = vadd.f32 %v95, -6.931472
    %v160 = vadd.f32 %v96, -6.931472
    %v161 = vadd.f32 %v97, -6.931472
    %v162 = vadd.f32 %v98, -6.931472
    %v163 = vadd.f32 %v99, -6.931472
    %v164 = vadd.f32 %v100, -6.931472
    %v165 = vadd.f32 %v101, -6.931472
    %v166 = vadd.f32 %v102, -6.931472
    %v167 = vadd.f32 %v103, -6.931472
    %v168 = vadd.f32 %v104, -6.931472
    %v169 = vadd.f32 %v105, -6.931472
    %v170 = vadd.f32 %v106, -6.931472
    %v171 = vadd.f32 %v107, -6.931472
    %v172 = vmul.f32 %v140, 1.442695
    %v173 = vpow.pop %v172
    %v174 = vmul.f32 %v141, 1.442695
    %v175 = vpow.pop %v174
    %v176 = vmul.f32 %v142, 1.442695
    %v177 = vpow.pop %v176
    %v178 = vmul.f32 %v143, 1.442695
    %v179 = vpow.pop %v178
    %v180 = vmul.f32 %v144, 1.442695
    %v181 = vpow.pop %v180
    %v182 = vmul.f32 %v145, 1.442695
    %v183 = vpow.pop %v182
    %v184 = vmul.f32 %v146, 1.442695
    %v185 = vpow.pop %v184
    %v186 = vmul.f32 %v147, 1.442695
    %v187 = vpow.pop %v186
    %v188 = vmul.f32 %v148, 1.442695
    %v189 = vpow.pop %v188
    %v190 = vmul.f32 %v149, 1.442695
    %v191 = vpow.pop %v190
    %v192 = vmul.f32 %v150, 1.442695
    %v193 = vpow.pop %v192
    %v194 = vmul.f32 %v151, 1.442695
    %v195 = vpow.pop %v194
    %v196 = vmul.f32 %v152, 1.442695
    %v197 = vpow.pop %v196
    %v198 = vmul.f32 %v153, 1.442695
    %v199 = vpow.pop %v198
    %v200 = vmul.f32 %v154, 1.442695
    %v201 = vpow.pop %v200
    %v202 = vmul.f32 %v155, 1.442695
    %v203 = vpow.pop %v202
    %v204 = vmul.f32 %v156, 1.442695
    %v205 = vpow.pop %v204
    %v206 = vmul.f32 %v157, 1.442695
    %v207 = vpow.pop %v206
    %v208 = vmul.f32 %v158, 1.442695
    %v209 = vpow.pop %v208
    %v210 = vmul.f32 %v159, 1.442695
    %v211 = vpow.pop %v210
    %v212 = vmul.f32 %v160, 1.442695
    %v213 = vpow.pop %v212
    %v214 = vmul.f32 %v161, 1.442695
    %v215 = vpow.pop %v214
    %v216 = vmul.f32 %v162, 1.442695
    %v217 = vpow.pop %v216
    %v218 = vmul.f32 %v163, 1.442695
    %v219 = vpow.pop %v218
    %v220 = vmul.f32 %v164, 1.442695
    %v221 = vpow.pop %v220
    %v222 = vmul.f32 %v165, 1.442695
    %v223 = vpow.pop %v222
    %v224 = vmul.f32 %v166, 1.442695
    %v225 = vpow.pop %v224
    %v226 = vmul.f32 %v167, 1.442695
    %v227 = vpow.pop %v226
    %v228 = vmul.f32 %v168, 1.442695
    %v229 = vpow.pop %v228
    %v230 = vmul.f32 %v169, 1.442695
    %v231 = vpow.pop %v230
    %v232 = vmul.f32 %v170, 1.442695
    %v233 = vpow.pop %v232
    %v234 = vmul.f32 %v171, 1.442695
    %v235 = vpow.pop %v234
    %236 = vst [vmem:[#allocation7] sm:$0xff] %v108
    %237 = vst [vmem:[#allocation7 + $0x8] sm:$0xff] %v109
    %238 = vst [vmem:[#allocation7 + $0x10] sm:$0xff] %v110
    %239 = vst [vmem:[#allocation7 + $0x18] sm:$0xff] %v111
    %240 = vst [vmem:[#allocation7 + $0x20] sm:$0xff] %v112
    %241 = vst [vmem:[#allocation7 + $0x28] sm:$0xff] %v113
    %242 = vst [vmem:[#allocation7 + $0x30] sm:$0xff] %v114
    %243 = vst [vmem:[#allocation7 + $0x38] sm:$0xff] %v115
    %244 = vst [vmem:[#allocation7 + $0x40] sm:$0xff] %v116
    %245 = vst [vmem:[#allocation7 + $0x48] sm:$0xff] %v117
    %246 = vst [vmem:[#allocation7 + $0x50] sm:$0xff] %v118
    %247 = vst [vmem:[#allocation7 + $0x58] sm:$0xff] %v119
    %248 = vst [vmem:[#allocation7 + $0x60] sm:$0xff] %v120
    %249 = vst [vmem:[#allocation7 + $0x68] sm:$0xff] %v121
    %250 = vst [vmem:[#allocation7 + $0x70] sm:$0xff] %v122
    %251 = vst [vmem:[#allocation7 + $0x78] sm:$0xff] %v123
    %252 = vst [vmem:[#allocation7 + $0x80] sm:$0xff] %v124
    %253 = vst [vmem:[#allocation7 + $0x88] sm:$0xff] %v125
    %254 = vst [vmem:[#allocation7 + $0x90] sm:$0xff] %v126
    %255 = vst [vmem:[#allocation7 + $0x98] sm:$0xff] %v127
    %256 = vst [vmem:[#allocation7 + $0xa0] sm:$0xff] %v128
    %257 = vst [vmem:[#allocation7 + $0xa8] sm:$0xff] %v129
    %258 = vst [vmem:[#allocation7 + $0xb0] sm:$0xff] %v130
    %259 = vst [vmem:[#allocation7 + $0xb8] sm:$0xff] %v131
    %260 = vst [vmem:[#allocation7 + $0xc0] sm:$0xff] %v132
    %261 = vst [vmem:[#allocation7 + $0xc8] sm:$0xff] %v133
    %262 = vst [vmem:[#allocation7 + $0xd0] sm:$0xff] %v134
    %263 = vst [vmem:[#allocation7 + $0xd8] sm:$0xff] %v135
    %264 = vst [vmem:[#allocation7 + $0xe0] sm:$0xff] %v136
    %265 = vst [vmem:[#allocation7 + $0xe8] sm:$0xff] %v137
    %266 = vst [vmem:[#allocation7 + $0xf0] sm:$0xff] %v138
    %267 = vst [vmem:[#allocation7 + $0xf8] sm:$0xff] %v139
    %268 = vst [vmem:[#allocation8] sm:$0xff] %v173
    %269 = vst [vmem:[#allocation8 + $0x8] sm:$0xff] %v175
    %270 = vst [vmem:[#allocation8 + $0x10] sm:$0xff] %v177
    %271 = vst [vmem:[#allocation8 + $0x18] sm:$0xff] %v179
    %272 = vst [vmem:[#allocation8 + $0x20] sm:$0xff] %v181
    %273 = vst [vmem:[#allocation8 + $0x28] sm:$0xff] %v183
    %274 = vst [vmem:[#allocation8 + $0x30] sm:$0xff] %v185
    %275 = vst [vmem:[#allocation8 + $0x38] sm:$0xff] %v187
    %276 = vst [vmem:[#allocation8 + $0x40] sm:$0xff] %v189
    %277 = vst [vmem:[#allocation8 + $0x48] sm:$0xff] %v191
    %278 = vst [vmem:[#allocation8 + $0x50] sm:$0xff] %v193
    %279 = vst [vmem:[#allocation8 + $0x58] sm:$0xff] %v195
    %280 = vst [vmem:[#allocation8 + $0x60] sm:$0xff] %v197
    %281 = vst [vmem:[#allocation8 + $0x68] sm:$0xff] %v199
    %282 = vst [vmem:[#allocation8 + $0x70] sm:$0xff] %v201
    %283 = vst [vmem:[#allocation8 + $0x78] sm:$0xff] %v203
    %284 = vst [vmem:[#allocation8 + $0x80] sm:$0xff] %v205
    %285 = vst [vmem:[#allocation8 + $0x88] sm:$0xff] %v207
    %286 = vst [vmem:[#allocation8 + $0x90] sm:$0xff] %v209
    %287 = vst [vmem:[#allocation8 + $0x98] sm:$0xff] %v211
    %288 = vst [vmem:[#allocation8 + $0xa0] sm:$0xff] %v213
    %289 = vst [vmem:[#allocation8 + $0xa8] sm:$0xff] %v215
    %290 = vst [vmem:[#allocation8 + $0xb0] sm:$0xff] %v217
    %291 = vst [vmem:[#allocation8 + $0xb8] sm:$0xff] %v219
    %292 = vst [vmem:[#allocation8 + $0xc0] sm:$0xff] %v221
    %293 = vst [vmem:[#allocation8 + $0xc8] sm:$0xff] %v223
    %294 = vst [vmem:[#allocation8 + $0xd0] sm:$0xff] %v225
    %295 = vst [vmem:[#allocation8 + $0xd8] sm:$0xff] %v227
    %296 = vst [vmem:[#allocation8 + $0xe0] sm:$0xff] %v229
    %297 = vst [vmem:[#allocation8 + $0xe8] sm:$0xff] %v231
    %298 = vst [vmem:[#allocation8 + $0xf0] sm:$0xff] %v233
    %299 = vst [vmem:[#allocation8 + $0xf8] sm:$0xff] %v235
    %v300 = vmul.f32 %v108, %v108
    %v301 = vmul.f32 %v109, %v109
    %v302 = vmul.f32 %v110, %v110
    %v303 = vmul.f32 %v111, %v111
    %v304 = vmul.f32 %v112, %v112
    %v305 = vmul.f32 %v113, %v113
    %v306 = vmul.f32 %v114, %v114
    %v307 = vmul.f32 %v115, %v115
    %v308 = vmul.f32 %v116, %v116
    %v309 = vmul.f32 %v117, %v117
    %v310 = vmul.f32 %v118, %v118
    %v311 = vmul.f32 %v119, %v119
    %v312 = vmul.f32 %v120, %v120
    %v313 = vmul.f32 %v121, %v121
    %v314 = vmul.f32 %v122, %v122
    %v315 = vmul.f32 %v123, %v123
    %v316 = vmul.f32 %v124, %v124
    %v317 = vmul.f32 %v125, %v125
    %v318 = vmul.f32 %v126, %v126
    %v319 = vmul.f32 %v127, %v127
    %v320 = vmul.f32 %v128, %v128
    %v321 = vmul.f32 %v129, %v129
    %v322 = vmul.f32 %v130, %v130
    %v323 = vmul.f32 %v131, %v131
    %v324 = vmul.f32 %v132, %v132
    %v325 = vmul.f32 %v133, %v133
    %v326 = vmul.f32 %v134, %v134
    %v327 = vmul.f32 %v135, %v135
    %v328 = vmul.f32 %v136, %v136
    %v329 = vmul.f32 %v137, %v137
    %v330 = vmul.f32 %v138, %v138
    %v331 = vmul.f32 %v139, %v139
    %v332 = vadd.f32 %v300, %v308
    %v333 = vadd.f32 %v332, %v316
    %v334 = vadd.f32 %v333, %v324
    %v335 = vrot.slane %v334, 4
    %v336 = vadd.f32 %v334, %v335
    %v337 = vrot.slane %v336, 2
    %v338 = vadd.f32 %v336, %v337
    %v339 = vrot.slane %v338, 1
    %v340 = vadd.f32 %v338, %v339
    %v341 = vadd.f32 %v301, %v309
    %v342 = vadd.f32 %v341, %v317
    %v343 = vadd.f32 %v342, %v325
    %v344 = vrot.slane %v343, 4
    %v345 = vadd.f32 %v343, %v344
    %v346 = vrot.slane %v345, 2
    %v347 = vadd.f32 %v345, %v346
    %v348 = vrot.slane %v347, 1
    %v349 = vadd.f32 %v347, %v348
    %v350 = vadd.f32 %v302, %v310
    %v351 = vadd.f32 %v350, %v318
    %v352 = vadd.f32 %v351, %v326
    %v353 = vrot.slane %v352, 4
    %v354 = vadd.f32 %v352, %v353
    %v355 = vrot.slane %v354, 2
    %v356 = vadd.f32 %v354, %v355
    %v357 = vrot.slane %v356, 1
    %v358 = vadd.f32 %v356, %v357
    %v359 = vadd.f32 %v303, %v311
    %v360 = vadd.f32 %v359, %v319
    %v361 = vadd.f32 %v360, %v327
    %v362 = vrot.slane %v361, 4
    %v363 = vadd.f32 %v361, %v362
    %v364 = vrot.slane %v363, 2
    %v365 = vadd.f32 %v363, %v364
    %v366 = vrot.slane %v365, 1
    %v367 = vadd.f32 %v365, %v366
    %v368 = vadd.f32 %v304, %v312
    %v369 = vadd.f32 %v368, %v320
    %v370 = vadd.f32 %v369, %v328
    %v371 = vrot.slane %v370, 4
    %v372 = vadd.f32 %v370, %v371
    %v373 = vrot.slane %v372, 2
    %v374 = vadd.f32 %v372, %v373
    %v375 = vrot.slane %v374, 1
    %v376 = vadd.f32 %v374, %v375
    %v377 = vadd.f32 %v305, %v313
    %v378 = vadd.f32 %v377, %v321
    %v379 = vadd.f32 %v378, %v329
    %v380 = vrot.slane %v379, 4
    %v381 = vadd.f32 %v379, %v380
    %v382 = vrot.slane %v381, 2
    %v383 = vadd.f32 %v381, %v382
    %v384 = vrot.slane %v383, 1
    %v385 = vadd.f32 %v383, %v384
    %v386 = vadd.f32 %v306, %v314
    %v387 = vadd.f32 %v386, %v322
    %v388 = vadd.f32 %v387, %v330
    %v389 = vrot.slane %v388, 4
    %v390 = vadd.f32 %v388, %v389
    %v391 = vrot.slane %v390, 2
    %v392 = vadd.f32 %v390, %v391
    %v393 = vrot.slane %v392, 1
    %v394 = vadd.f32 %v392, %v393
    %v395 = vadd.f32 %v307, %v315
    %v396 = vadd.f32 %v395, %v323
    %v397 = vadd.f32 %v396, %v331
    %v398 = vrot.slane %v397, 4
    %v399 = vadd.f32 %v397, %v398
    %v400 = vrot.slane %v399, 2
    %v401 = vadd.f32 %v399, %v400
    %v402 = vrot.slane %v401, 1
    %v403 = vadd.f32 %v401, %v402
    %v412 = vcombine.low %v340, %v349
    %v413 = vcombine.low %v358, %v367
    %v414 = vcombine.low %v376, %v385
    %v415 = vcombine.low %v394, %v403
    %v417 = vunpack.c.l.s4 1966171168
    %v418 = vunpack.c.0.s8 %v417
    %v419 = vlaneseq
    %v420 = vshrl.u32 %v419, 7
    %v421 = vsub.s32 %v418, %v420
    %v422 = vrot.slane %v412, %v421
    %v424 = vunpack.c.l.s4 1966171168
    %v425 = vunpack.c.0.s8 %v424
    %v426 = vlaneseq
    %v427 = vshrl.u32 %v426, 7
    %v428 = vsub.s32 %v425, %v427
    %v429 = vrot.slane %v413, %v428
    %v431 = vunpack.c.l.s4 1966171168
    %v432 = vunpack.c.0.s8 %v431
    %v433 = vlaneseq
    %v434 = vshrl.u32 %v433, 7
    %v435 = vsub.s32 %v432, %v434
    %v436 = vrot.slane %v414, %v435
    %v438 = vunpack.c.l.s4 1966171168
    %v439 = vunpack.c.0.s8 %v438
    %v440 = vlaneseq
    %v441 = vshrl.u32 %v440, 7
    %v442 = vsub.s32 %v439, %v441
    %v443 = vrot.slane %v415, %v442
    %v444 = vcombine.low %v422, %v429
    %v445 = vcombine.low %v436, %v443
    %v447 = vunpack.c.l.s4 1966171168
    %v448 = vunpack.c.0.s8 %v447
    %v449 = vlaneseq
    %v450 = vshrl.u32 %v449, 7
    %v451 = vsub.s32 %v448, %v450
    %v452 = vrot.slane %v444, %v451
    %v454 = vunpack.c.l.s4 1966171168
    %v455 = vunpack.c.0.s8 %v454
    %v456 = vlaneseq
    %v457 = vshrl.u32 %v456, 7
    %v458 = vsub.s32 %v455, %v457
    %v459 = vrot.slane %v445, %v458
    %v460 = vcombine.low %v452, %v459
    %462 = vst [vmem:[%s4] ss:$4 sm:$0xff] %v460
    %v463 = vadd.f32 %v173, %v189
    %v464 = vadd.f32 %v463, %v205
    %v465 = vadd.f32 %v464, %v221
    %v466 = vrot.slane %v465, 4
    %v467 = vadd.f32 %v465, %v466
    %v468 = vrot.slane %v467, 2
    %v469 = vadd.f32 %v467, %v468
    %v470 = vrot.slane %v469, 1
    %v471 = vadd.f32 %v469, %v470
    %v472 = vadd.f32 %v175, %v191
    %v473 = vadd.f32 %v472, %v207
    %v474 = vadd.f32 %v473, %v223
    %v475 = vrot.slane %v474, 4
    %v476 = vadd.f32 %v474, %v475
    %v477 = vrot.slane %v476, 2
    %v478 = vadd.f32 %v476, %v477
    %v479 = vrot.slane %v478, 1
    %v480 = vadd.f32 %v478, %v479
    %v481 = vadd.f32 %v177, %v193
    %v482 = vadd.f32 %v481, %v209
    %v483 = vadd.f32 %v482, %v225
    %v484 = vrot.slane %v483, 4
    %v485 = vadd.f32 %v483, %v484
    %v486 = vrot.slane %v485, 2
    %v487 = vadd.f32 %v485, %v486
    %v488 = vrot.slane %v487, 1
    %v489 = vadd.f32 %v487, %v488
    %v490 = vadd.f32 %v179, %v195
    %v491 = vadd.f32 %v490, %v211
    %v492 = vadd.f32 %v491, %v227
    %v493 = vrot.slane %v492, 4
    %v494 = vadd.f32 %v492, %v493
    %v495 = vrot.slane %v494, 2
    %v496 = vadd.f32 %v494, %v495
    %v497 = vrot.slane %v496, 1
    %v498 = vadd.f32 %v496, %v497
    %v499 = vadd.f32 %v181, %v197
    %v500 = vadd.f32 %v499, %v213
    %v501 = vadd.f32 %v500, %v229
    %v502 = vrot.slane %v501, 4
    %v503 = vadd.f32 %v501, %v502
    %v504 = vrot.slane %v503, 2
    %v505 = vadd.f32 %v503, %v504
    %v506 = vrot.slane %v505, 1
    %v507 = vadd.f32 %v505, %v506
    %v508 = vadd.f32 %v183, %v199
    %v509 = vadd.f32 %v508, %v215
    %v510 = vadd.f32 %v509, %v231
    %v511 = vrot.slane %v510, 4
    %v512 = vadd.f32 %v510, %v511
    %v513 = vrot.slane %v512, 2
    %v514 = vadd.f32 %v512, %v513
    %v515 = vrot.slane %v514, 1
    %v516 = vadd.f32 %v514, %v515
    %v517 = vadd.f32 %v185, %v201
    %v518 = vadd.f32 %v517, %v217
    %v519 = vadd.f32 %v518, %v233
    %v520 = vrot.slane %v519, 4
    %v521 = vadd.f32 %v519, %v520
    %v522 = vrot.slane %v521, 2
    %v523 = vadd.f32 %v521, %v522
    %v524 = vrot.slane %v523, 1
    %v525 = vadd.f32 %v523, %v524
    %v526 = vadd.f32 %v187, %v203
    %v527 = vadd.f32 %v526, %v219
    %v528 = vadd.f32 %v527, %v235
    %v529 = vrot.slane %v528, 4
    %v530 = vadd.f32 %v528, %v529
    %v531 = vrot.slane %v530, 2
    %v532 = vadd.f32 %v530, %v531
    %v533 = vrot.slane %v532, 1
    %v534 = vadd.f32 %v532, %v533
    %v543 = vcombine.low %v471, %v480
    %v544 = vcombine.low %v489, %v498
    %v545 = vcombine.low %v507, %v516
    %v546 = vcombine.low %v525, %v534
    %v548 = vunpack.c.l.s4 1966171168
    %v549 = vunpack.c.0.s8 %v548
    %v550 = vlaneseq
    %v551 = vshrl.u32 %v550, 7
    %v552 = vsub.s32 %v549, %v551
    %v553 = vrot.slane %v543, %v552
    %v555 = vunpack.c.l.s4 1966171168
    %v556 = vunpack.c.0.s8 %v555
    %v557 = vlaneseq
    %v558 = vshrl.u32 %v557, 7
    %v559 = vsub.s32 %v556, %v558
    %v560 = vrot.slane %v544, %v559
    %v562 = vunpack.c.l.s4 1966171168
    %v563 = vunpack.c.0.s8 %v562
    %v564 = vlaneseq
    %v565 = vshrl.u32 %v564, 7
    %v566 = vsub.s32 %v563, %v565
    %v567 = vrot.slane %v545, %v566
    %v569 = vunpack.c.l.s4 1966171168
    %v570 = vunpack.c.0.s8 %v569
    %v571 = vlaneseq
    %v572 = vshrl.u32 %v571, 7
    %v573 = vsub.s32 %v570, %v572
    %v574 = vrot.slane %v546, %v573
    %v575 = vcombine.low %v553, %v560
    %v576 = vcombine.low %v567, %v574
    %v578 = vunpack.c.l.s4 1966171168
    %v579 = vunpack.c.0.s8 %v578
    %v580 = vlaneseq
    %v581 = vshrl.u32 %v580, 7
    %v582 = vsub.s32 %v579, %v581
    %v583 = vrot.slane %v575, %v582
    %v585 = vunpack.c.l.s4 1966171168
    %v586 = vunpack.c.0.s8 %v585
    %v587 = vlaneseq
    %v588 = vshrl.u32 %v587, 7
    %v589 = vsub.s32 %v586, %v588
    %v590 = vrot.slane %v576, %v589
    %v591 = vcombine.low %v583, %v590
    %s593 = scalar_lea.vmem %s4, 1
    %594 = vst [vmem:[%s593] ss:$4 sm:$0xff] %v591
    %v595 = vadd.f32 %v140, %v148
    %v596 = vadd.f32 %v595, %v156
    %v597 = vadd.f32 %v596, %v164
    %v598 = vrot.slane %v597, 4
    %v599 = vadd.f32 %v597, %v598
    %v600 = vrot.slane %v599, 2
    %v601 = vadd.f32 %v599, %v600
    %v602 = vrot.slane %v601, 1
    %v603 = vadd.f32 %v601, %v602
    %v604 = vadd.f32 %v141, %v149
    %v605 = vadd.f32 %v604, %v157
    %v606 = vadd.f32 %v605, %v165
    %v607 = vrot.slane %v606, 4
    %v608 = vadd.f32 %v606, %v607
    %v609 = vrot.slane %v608, 2
    %v610 = vadd.f32 %v608, %v609
    %v611 = vrot.slane %v610, 1
    %v612 = vadd.f32 %v610, %v611
    %v613 = vadd.f32 %v142, %v150
    %v614 = vadd.f32 %v613, %v158
    %v615 = vadd.f32 %v614, %v166
    %v616 = vrot.slane %v615, 4
    %v617 = vadd.f32 %v615, %v616
    %v618 = vrot.slane %v617, 2
    %v619 = vadd.f32 %v617, %v618
    %v620 = vrot.slane %v619, 1
    %v621 = vadd.f32 %v619, %v620
    %v622 = vadd.f32 %v143, %v151
    %v623 = vadd.f32 %v622, %v159
    %v624 = vadd.f32 %v623, %v167
    %v625 = vrot.slane %v624, 4
    %v626 = vadd.f32 %v624, %v625
    %v627 = vrot.slane %v626, 2
    %v628 = vadd.f32 %v626, %v627
    %v629 = vrot.slane %v628, 1
    %v630 = vadd.f32 %v628, %v629
    %v631 = vadd.f32 %v144, %v152
    %v632 = vadd.f32 %v631, %v160
    %v633 = vadd.f32 %v632, %v168
    %v634 = vrot.slane %v633, 4
    %v635 = vadd.f32 %v633, %v634
    %v636 = vrot.slane %v635, 2
    %v637 = vadd.f32 %v635, %v636
    %v638 = vrot.slane %v637, 1
    %v639 = vadd.f32 %v637, %v638
    %v640 = vadd.f32 %v145, %v153
    %v641 = vadd.f32 %v640, %v161
    %v642 = vadd.f32 %v641, %v169
    %v643 = vrot.slane %v642, 4
    %v644 = vadd.f32 %v642, %v643
    %v645 = vrot.slane %v644, 2
    %v646 = vadd.f32 %v644, %v645
    %v647 = vrot.slane %v646, 1
    %v648 = vadd.f32 %v646, %v647
    %v649 = vadd.f32 %v146, %v154
    %v650 = vadd.f32 %v649, %v162
    %v651 = vadd.f32 %v650, %v170
    %v652 = vrot.slane %v651, 4
    %v653 = vadd.f32 %v651, %v652
    %v654 = vrot.slane %v653, 2
    %v655 = vadd.f32 %v653, %v654
    %v656 = vrot.slane %v655, 1
    %v657 = vadd.f32 %v655, %v656
    %v658 = vadd.f32 %v147, %v155
    %v659 = vadd.f32 %v658, %v163
    %v660 = vadd.f32 %v659, %v171
    %v661 = vrot.slane %v660, 4
    %v662 = vadd.f32 %v660, %v661
    %v663 = vrot.slane %v662, 2
    %v664 = vadd.f32 %v662, %v663
    %v665 = vrot.slane %v664, 1
    %v666 = vadd.f32 %v664, %v665
    %v675 = vcombine.low %v603, %v612
    %v676 = vcombine.low %v621, %v630
    %v677 = vcombine.low %v639, %v648
    %v678 = vcombine.low %v657, %v666
    %v680 = vunpack.c.l.s4 1966171168
    %v681 = vunpack.c.0.s8 %v680
    %v682 = vlaneseq
    %v683 = vshrl.u32 %v682, 7
    %v684 = vsub.s32 %v681, %v683
    %v685 = vrot.slane %v675, %v684
    %v687 = vunpack.c.l.s4 1966171168
    %v688 = vunpack.c.0.s8 %v687
    %v689 = vlaneseq
    %v690 = vshrl.u32 %v689, 7
    %v691 = vsub.s32 %v688, %v690
    %v692 = vrot.slane %v676, %v691
    %v694 = vunpack.c.l.s4 1966171168
    %v695 = vunpack.c.0.s8 %v694
    %v696 = vlaneseq
    %v697 = vshrl.u32 %v696, 7
    %v698 = vsub.s32 %v695, %v697
    %v699 = vrot.slane %v677, %v698
    %v701 = vunpack.c.l.s4 1966171168
    %v702 = vunpack.c.0.s8 %v701
    %v703 = vlaneseq
    %v704 = vshrl.u32 %v703, 7
    %v705 = vsub.s32 %v702, %v704
    %v706 = vrot.slane %v678, %v705
    %v707 = vcombine.low %v685, %v692
    %v708 = vcombine.low %v699, %v706
    %v710 = vunpack.c.l.s4 1966171168
    %v711 = vunpack.c.0.s8 %v710
    %v712 = vlaneseq
    %v713 = vshrl.u32 %v712, 7
    %v714 = vsub.s32 %v711, %v713
    %v715 = vrot.slane %v707, %v714
    %v717 = vunpack.c.l.s4 1966171168
    %v718 = vunpack.c.0.s8 %v717
    %v719 = vlaneseq
    %v720 = vshrl.u32 %v719, 7
    %v721 = vsub.s32 %v718, %v720
    %v722 = vrot.slane %v708, %v721
    %v723 = vcombine.low %v715, %v722
    %s725 = scalar_lea.vmem %s4, 2
    %726 = vst [vmem:[%s725] ss:$4 sm:$0xff] %v723
    // Predicated region
    $region18: #{factorised_lr_param_forward.1} parent=1 // pred_check
      _
    $region19: #{factorised_lr_param_forward.1} parent=1 // pred_check_branch
      %728 = sbr.rel (0) target = $region21
    $region20: #{factorised_lr_param_forward.1} parent=1 // pred_region
      %s730 = ssub.s32 4096, 4096
      %731 = vsyncadd [#allocation4], %s730
      %s732 = sshll.u32 [#allocation7], 4
      %s733 = int_to_ptr.vmem [resolvable:$true] %s732
      %738 = dma.vmem_to_hbm [thread:$0]  %s733, 4096, %s2, [#allocation4], 1024, 1024, 64
    $region21: #{factorised_lr_param_forward.1} parent=1 // pred_fallthru
      _
    // Predicated region
    $region22: #{factorised_lr_param_forward.1} parent=1 // pred_check
      _
    $region23: #{factorised_lr_param_forward.1} parent=1 // pred_check_branch
      %740 = sbr.rel (0) target = $region25
    $region24: #{factorised_lr_param_forward.1} parent=1 // pred_region
      %s742 = ssub.s32 4096, 4096
      %743 = vsyncadd [#allocation9], %s742
      %s744 = sshll.u32 [#allocation8], 4
      %s745 = int_to_ptr.vmem [resolvable:$true] %s744
      %750 = dma.vmem_to_hbm [thread:$0]  %s745, 4096, %s3, [#allocation9], 1024, 1024, 64
    $region25: #{factorised_lr_param_forward.1} parent=1 // pred_fallthru
      _
    // Predicated region
    $region26: #{factorised_lr_param_forward.1} parent=1 // pred_check
      _
    $region27: #{factorised_lr_param_forward.1} parent=1 // pred_check_branch
      %752 = sbr.rel (0) target = $region29
    $region28: #{factorised_lr_param_forward.1} parent=1 // pred_region
      _
    $region29: #{factorised_lr_param_forward.1} parent=1 // pred_fallthru
      _
    // Predicated region
    $region30: #{factorised_lr_param_forward.1} parent=1 // pred_check
      _
    $region31: #{factorised_lr_param_forward.1} parent=1 // pred_check_branch
      %754 = sbr.rel (0) target = $region33
    $region32: #{factorised_lr_param_forward.1} parent=1 // pred_region
      %755 = dma.done [#allocation4], 4096
    $region33: #{factorised_lr_param_forward.1} parent=1 // pred_fallthru
      _
    // Predicated region
    $region34: #{factorised_lr_param_forward.1} parent=1 // pred_check
      _
    $region35: #{factorised_lr_param_forward.1} parent=1 // pred_check_branch
      %757 = sbr.rel (0) target = $region37
    $region36: #{factorised_lr_param_forward.1} parent=1 // pred_region
      %758 = dma.done [#allocation9], 4096
    $region37: #{factorised_lr_param_forward.1} parent=1 // pred_fallthru
      _
    // Predicated region
    $region38: #{factorised_lr_param_forward.1} parent=1 // pred_check
      _
    $region39: #{factorised_lr_param_forward.1} parent=1 // pred_check_branch
      %760 = sbr.rel (0) target = $region41
    $region40: #{factorised_lr_param_forward.1} parent=1 // pred_region
      _
    $region41: #{factorised_lr_param_forward.1} parent=1 // pred_fallthru
      _
    %761 = vsyncpa [#allocation3], 1
    %762 = vsyncpa [#allocation6], 1
    %763 = vsyncpa [#allocation4], 1
    %764 = vsyncpa [#allocation9], 1

</llo_original>
